<compile_context>
chip_gen: v7x
topology: tpu7x:2x2x1
jax: 0.10.0
libtpu: 0.0.40
codegen_flags: <defaults>
</compile_context>

<pallas_src>
import jax
import jax.numpy as jnp
from jax.experimental import pallas as pl
from jax.experimental.pallas import tpu as pltpu


def qnetwork_kernel(xT_ref, w1T_ref, b1_ref, w2T_ref, b2_ref, w3T_ref, b3_ref, oT_ref):
    """Feature-major fused MLP. All activations are [features, TILE_B] (batch on lanes)."""
    # In-kernel cast of the streamed input to bf16 (MXU-native), f32 accumulation.
    xT = xT_ref[...].astype(jnp.bfloat16)                                   # [S, TB]
    # Layer 1: [h1, S] @ [S, TB] -> [h1, TB], bias ([h1,1]) + ReLU in f32 on the VPU.
    h = jnp.dot(w1T_ref[...], xT, preferred_element_type=jnp.float32)
    h = jnp.maximum(h + b1_ref[...], 0.0)
    # Layer 2: [h2, h1] @ [h1, TB] -> [h2, TB].
    h = jnp.dot(w2T_ref[...], h.astype(jnp.bfloat16),
                preferred_element_type=jnp.float32)
    h = jnp.maximum(h + b2_ref[...], 0.0)
    # Output layer: [A, h2] @ [h2, TB] -> [A, TB] (no activation).
    q = jnp.dot(w3T_ref[...], h.astype(jnp.bfloat16),
                preferred_element_type=jnp.float32)
    oT_ref[...] = (q + b3_ref[...]).astype(oT_ref.dtype)


def _round_up(n, m):
    return ((n + m - 1) // m) * m


def _cdiv(a, b):
    return (a + b - 1) // b


def prepare_qnetwork_params(params):
    """One-time (init / param-update time) prep: W -> W^T in bf16, b -> [out, 1] f32."""
    prepped = []
    for W, b in params:
        wT = jnp.asarray(W).T.astype(jnp.bfloat16)           # [out, in], MXU dtype
        bc = jnp.asarray(b).reshape(-1, 1).astype(jnp.float32)  # [out, 1], f32 bias
        prepped.append((wT, bc))
    return prepped


def qnetwork_forward(x, prepared_params, *, tile_b=2048):
    """x: [B, state_dim] f32; prepared_params: output of prepare_qnetwork_params."""
    (w1T, b1), (w2T, b2), (w3T, b3) = prepared_params
    B, state_dim = x.shape
    h1 = w1T.shape[0]
    h2 = w2T.shape[0]
    action_dim = w3T.shape[0]
    assert w1T.shape == (h1, state_dim) and w2T.shape == (h2, h1) and w3T.shape == (action_dim, h2)

    LANE = 128
    tile_b = max(LANE, int(tile_b))
    B_aligned = _round_up(B, LANE)
    n_steps = max(1, _cdiv(B_aligned, tile_b))
    # v7x megacore: make sure the "parallel" batch axis has >= 2 steps to shard across
    # both TensorCores once the batch is large enough to be worth splitting.
    if B_aligned > 256:
        n_steps = max(n_steps, 2)
    TILE_B = _round_up(_cdiv(B_aligned, n_steps), LANE)
    B_pad = TILE_B * n_steps

    # Feature-major input: [state_dim, B_pad]; padded columns are sliced off at the end.
    xT = x.T
    if B_pad != B:
        xT = jnp.pad(xT, ((0, 0), (0, B_pad - B)))

    flops = 2 * B_pad * (state_dim * h1 + h1 * h2 + h2 * action_dim)
    bytes_accessed = (
        B_pad * state_dim * 4                                      # x (f32) read
        + B_pad * action_dim * 4                                   # q (f32) write
        + (state_dim * h1 + h1 * h2 + h2 * action_dim) * 2         # weights (bf16)
        + (h1 + h2 + action_dim) * 4                               # biases (f32)
    )

    kernel = pl.pallas_call(
        qnetwork_kernel,
        out_shape=jax.ShapeDtypeStruct((action_dim, B_pad), jnp.float32),
        grid=(n_steps,),
        in_specs=[
            pl.BlockSpec((state_dim, TILE_B), lambda i: (0, i)),    # x^T: streamed, lane-dense
            pl.BlockSpec((h1, state_dim), lambda i: (0, 0)),        # W1^T: VMEM-resident
            pl.BlockSpec((h1, 1), lambda i: (0, 0)),                # b1
            pl.BlockSpec((h2, h1), lambda i: (0, 0)),               # W2^T
            pl.BlockSpec((h2, 1), lambda i: (0, 0)),                # b2
            pl.BlockSpec((action_dim, h2), lambda i: (0, 0)),       # W3^T
            pl.BlockSpec((action_dim, 1), lambda i: (0, 0)),        # b3
        ],
        out_specs=pl.BlockSpec((action_dim, TILE_B), lambda i: (0, i)),  # q^T: lane-dense
        compiler_params=pltpu.CompilerParams(
            dimension_semantics=("parallel",),
        ),
        cost_estimate=pl.CostEstimate(
            flops=flops, transcendentals=0, bytes_accessed=bytes_accessed
        ),
    )
    qT = kernel(xT, w1T, b1, w2T, b2, w3T, b3)
    return qT[:, :B].T


def init_linear(key, in_dim, out_dim):
    """Deterministic init mimicking PyTorch nn.Linear default (uniform +/- 1/sqrt(fan_in))."""
    kw, kb = jax.random.split(key)
    bound = 1.0 / jnp.sqrt(jnp.float32(in_dim))
    W = jax.random.uniform(kw, (in_dim, out_dim), jnp.float32, -bound, bound)
    b = jax.random.uniform(kb, (1, out_dim), jnp.float32, -bound, bound)
    return W, b


if __name__ == "__main__":
    # Small, forward-consistent shapes (PyTorch default hidden_sizes=(128, 128)).
    batch = 2
    state_dim = 8
    action_dim = 4
    hidden_sizes = (128, 128)

    key = jax.random.PRNGKey(0)
    k_x, k1, k2, k3 = jax.random.split(key, 4)

    x = jax.random.normal(k_x, (batch, state_dim), jnp.float32)

    dims = [state_dim, hidden_sizes[0], hidden_sizes[1], action_dim]
    params = [
        init_linear(k1, dims[0], dims[1]),
        init_linear(k2, dims[1], dims[2]),
        init_linear(k3, dims[2], dims[3]),
    ]
    prepared = prepare_qnetwork_params(params)

    q = qnetwork_forward(x, prepared)
    q = jax.block_until_ready(q)

    # Reference 1: mirrors the kernel math (bf16 MXU inputs, f32 accumulation/bias).
    def ref_bf16(x, params):
        (w1, b1), (w2, b2), (w3, b3) = params
        bf = jnp.bfloat16
        h = jnp.dot(x.astype(bf), w1.astype(bf), preferred_element_type=jnp.float32) + b1
        h = jnp.maximum(h, 0.0)
        h = jnp.dot(h.astype(bf), w2.astype(bf), preferred_element_type=jnp.float32) + b2
        h = jnp.maximum(h, 0.0)
        return jnp.dot(h.astype(bf), w3.astype(bf), preferred_element_type=jnp.float32) + b3

    # Reference 2: pure f32 (sanity check that bf16 casting stays accurate).
    def ref_f32(x, params):
        (w1, b1), (w2, b2), (w3, b3) = params
        h = jnp.maximum(x @ w1 + b1, 0.0)
        h = jnp.maximum(h @ w2 + b2, 0.0)
        return h @ w3 + b3

    q_ref = ref_bf16(x, params)
    q_f32 = ref_f32(x, params)

    assert q.shape == (batch, action_dim)
    assert jnp.allclose(q, q_ref, atol=1e-3, rtol=1e-3), (q, q_ref)
    assert jnp.allclose(q, q_f32, atol=3e-2, rtol=3e-2), (q, q_f32)

    print("KERNEL_OK")
</pallas_src>

<mosaic_0001>
module attributes {stable_mosaic.version = 11 : i64} {
  func.func @qnetwork_kernel(%arg0: i32, %arg1: memref<8x128xf32, #tpu.memory_space<vmem>>, %arg2: memref<128x8xbf16, #tpu.memory_space<vmem>>, %arg3: memref<128x1xf32, #tpu.memory_space<vmem>>, %arg4: memref<128x128xbf16, #tpu.memory_space<vmem>>, %arg5: memref<128x1xf32, #tpu.memory_space<vmem>>, %arg6: memref<4x128xbf16, #tpu.memory_space<vmem>>, %arg7: memref<4x1xf32, #tpu.memory_space<vmem>>, %arg8: memref<4x128xf32, #tpu.memory_space<vmem>>) attributes {dimension_semantics = [#tpu.dimension_semantics<parallel>], iteration_bounds = array<i64: 1>, scalar_prefetch = 0 : i64, scratch_operands = 0 : i64, tpu.core_type = #tpu.core_type<tc>, window_params = [{transform_indices = @transform_0, window_bounds = array<i64: 8, 128>}, {pipeline_mode = #tpu.pipeline_mode<synchronous>, transform_indices = @transform_1, window_bounds = array<i64: 128, 8>}, {pipeline_mode = #tpu.pipeline_mode<synchronous>, transform_indices = @transform_2, window_bounds = array<i64: 128, 1>}, {pipeline_mode = #tpu.pipeline_mode<synchronous>, transform_indices = @transform_3, window_bounds = array<i64: 128, 128>}, {pipeline_mode = #tpu.pipeline_mode<synchronous>, transform_indices = @transform_4, window_bounds = array<i64: 128, 1>}, {pipeline_mode = #tpu.pipeline_mode<synchronous>, transform_indices = @transform_5, window_bounds = array<i64: 4, 128>}, {pipeline_mode = #tpu.pipeline_mode<synchronous>, transform_indices = @transform_6, window_bounds = array<i64: 4, 1>}, {transform_indices = @transform_7, window_bounds = array<i64: 4, 128>}]} {
    %c0 = arith.constant 0 : index
    %c0_0 = arith.constant 0 : index
    %0 = vector.load %arg1[%c0, %c0_0] : memref<8x128xf32, #tpu.memory_space<vmem>>, vector<8x128xf32>
    %1 = arith.truncf %0 : vector<8x128xf32> to vector<8x128xbf16>
    %c0_1 = arith.constant 0 : index
    %c0_2 = arith.constant 0 : index
    %2 = vector.load %arg2[%c0_1, %c0_2] : memref<128x8xbf16, #tpu.memory_space<vmem>>, vector<128x8xbf16>
    %cst = arith.constant dense<0.000000e+00> : vector<128x128xf32>
    %3 = tpu.matmul %2, %1, %cst {dimension_numbers = #tpu.dot_dimension_numbers<[1], [0], [0], [1], [0, 0, 1, 1], [], []>} : vector<128x8xbf16>, vector<8x128xbf16>, vector<128x128xf32> -> vector<128x128xf32>
    %c0_3 = arith.constant 0 : index
    %c0_4 = arith.constant 0 : index
    %4 = vector.load %arg3[%c0_3, %c0_4] : memref<128x1xf32, #tpu.memory_space<vmem>>, vector<128x1xf32>
    %5 = vector.broadcast %4 : vector<128x1xf32> to vector<128x128xf32>
    %6 = arith.addf %3, %5 : vector<128x128xf32>
    %cst_5 = arith.constant 0.000000e+00 : f32
    %7 = vector.broadcast %cst_5 : f32 to vector<128x128xf32>
    %8 = arith.maximumf %6, %7 : vector<128x128xf32>
    %c0_6 = arith.constant 0 : index
    %c0_7 = arith.constant 0 : index
    %9 = vector.load %arg4[%c0_6, %c0_7] : memref<128x128xbf16, #tpu.memory_space<vmem>>, vector<128x128xbf16>
    %10 = arith.truncf %8 : vector<128x128xf32> to vector<128x128xbf16>
    %cst_8 = arith.constant dense<0.000000e+00> : vector<128x128xf32>
    %11 = tpu.matmul %9, %10, %cst_8 {dimension_numbers = #tpu.dot_dimension_numbers<[1], [0], [0], [1], [0, 0, 1, 1], [], []>} : vector<128x128xbf16>, vector<128x128xbf16>, vector<128x128xf32> -> vector<128x128xf32>
    %c0_9 = arith.constant 0 : index
    %c0_10 = arith.constant 0 : index
    %12 = vector.load %arg5[%c0_9, %c0_10] : memref<128x1xf32, #tpu.memory_space<vmem>>, vector<128x1xf32>
    %13 = vector.broadcast %12 : vector<128x1xf32> to vector<128x128xf32>
    %14 = arith.addf %11, %13 : vector<128x128xf32>
    %cst_11 = arith.constant 0.000000e+00 : f32
    %15 = vector.broadcast %cst_11 : f32 to vector<128x128xf32>
    %16 = arith.maximumf %14, %15 : vector<128x128xf32>
    %c0_12 = arith.constant 0 : index
    %c0_13 = arith.constant 0 : index
    %17 = vector.load %arg6[%c0_12, %c0_13] : memref<4x128xbf16, #tpu.memory_space<vmem>>, vector<4x128xbf16>
    %18 = arith.truncf %16 : vector<128x128xf32> to vector<128x128xbf16>
    %cst_14 = arith.constant dense<0.000000e+00> : vector<4x128xf32>
    %19 = tpu.matmul %17, %18, %cst_14 {dimension_numbers = #tpu.dot_dimension_numbers<[1], [0], [0], [1], [0, 0, 1, 1], [], []>} : vector<4x128xbf16>, vector<128x128xbf16>, vector<4x128xf32> -> vector<4x128xf32>
    %c0_15 = arith.constant 0 : index
    %c0_16 = arith.constant 0 : index
    %20 = vector.load %arg7[%c0_15, %c0_16] : memref<4x1xf32, #tpu.memory_space<vmem>>, vector<4x1xf32>
    %21 = vector.broadcast %20 : vector<4x1xf32> to vector<4x128xf32>
    %22 = arith.addf %19, %21 : vector<4x128xf32>
    %c0_17 = arith.constant 0 : index
    %c0_18 = arith.constant 0 : index
    %23 = vector.load %arg8[%c0_17, %c0_18] : memref<4x128xf32, #tpu.memory_space<vmem>>, vector<4x128xf32>
    tpu.vector_store %arg8[%c0_17, %c0_18], %22 {strides = array<i32>} : memref<4x128xf32, #tpu.memory_space<vmem>>, vector<4x128xf32>,
    return
  }
  func.func @transform_0(%arg0: i32) -> (i32, i32) {
    %c0_i32 = arith.constant 0 : i32
    %c0_i32_0 = arith.constant 0 : i32
    return %c0_i32, %arg0 : i32, i32
  }
  func.func @transform_1(%arg0: i32) -> (i32, i32) {
    %c0_i32 = arith.constant 0 : i32
    %c0_i32_0 = arith.constant 0 : i32
    %c0_i32_1 = arith.constant 0 : i32
    return %c0_i32, %c0_i32_0 : i32, i32
  }
  func.func @transform_2(%arg0: i32) -> (i32, i32) {
    %c0_i32 = arith.constant 0 : i32
    %c0_i32_0 = arith.constant 0 : i32
    %c0_i32_1 = arith.constant 0 : i32
    return %c0_i32, %c0_i32_0 : i32, i32
  }
  func.func @transform_3(%arg0: i32) -> (i32, i32) {
    %c0_i32 = arith.constant 0 : i32
    %c0_i32_0 = arith.constant 0 : i32
    %c0_i32_1 = arith.constant 0 : i32
    return %c0_i32, %c0_i32_0 : i32, i32
  }
  func.func @transform_4(%arg0: i32) -> (i32, i32) {
    %c0_i32 = arith.constant 0 : i32
    %c0_i32_0 = arith.constant 0 : i32
    %c0_i32_1 = arith.constant 0 : i32
    return %c0_i32, %c0_i32_0 : i32, i32
  }
  func.func @transform_5(%arg0: i32) -> (i32, i32) {
    %c0_i32 = arith.constant 0 : i32
    %c0_i32_0 = arith.constant 0 : i32
    %c0_i32_1 = arith.constant 0 : i32
    return %c0_i32, %c0_i32_0 : i32, i32
  }
  func.func @transform_6(%arg0: i32) -> (i32, i32) {
    %c0_i32 = arith.constant 0 : i32
    %c0_i32_0 = arith.constant 0 : i32
    %c0_i32_1 = arith.constant 0 : i32
    return %c0_i32, %c0_i32_0 : i32, i32
  }
  func.func @transform_7(%arg0: i32) -> (i32, i32) {
    %c0_i32 = arith.constant 0 : i32
    %c0_i32_0 = arith.constant 0 : i32
    return %c0_i32, %arg0 : i32, i32
  }
}

</mosaic_0001>

<llo_original>
// kernel: tpu_custom_call.1
$region0: #{tpu_custom_call.1}
  #allocation0 [shape = 'u32[]', space=smem, size = 0x4, offset = 0x4, fixed_abs, tag = 'smem constant byte address 0x4 - core index']
  #allocation1 [shape = 'u32[144,128]{1,0:T(1,128)}', space=vmem, size = 0x12000, scoped, tag = 'internal scratch']
  %s0 = inlined_call_operand.vmem [shape: f32[8,128], index: 0, kind: input, shape index: {}]
  %s1 = inlined_call_operand.vmem [shape: bf16[128,8], index: 1, kind: input, shape index: {}]
  %s2 = inlined_call_operand.vmem [shape: f32[128,1], index: 2, kind: input, shape index: {}]
  %s3 = inlined_call_operand.vmem [shape: bf16[128,128], index: 3, kind: input, shape index: {}]
  %s4 = inlined_call_operand.vmem [shape: f32[128,1], index: 4, kind: input, shape index: {}]
  %s5 = inlined_call_operand.vmem [shape: bf16[4,128], index: 5, kind: input, shape index: {}]
  %s6 = inlined_call_operand.vmem [shape: f32[4,1], index: 6, kind: input, shape index: {}]
  %s7 = inlined_call_operand.hbm [shape: f32[4,128], index: 7, kind: output, shape index: {}]
  %s8 = sld [smem:[#allocation0]]
  $region38: #{tpu_custom_call.1} parent=0
    _
  %s10 = ssub.s32 1, %s8
  %s11 = scalar_select 0, %s10, %s8
  $region1: #{tpu_custom_call.1} parent=0
    #allocation2 [shape = 'u8[2048]{0}', space=vmem, size = 0x800, scoped, tag = 'output window, operand 0, single buffered']
    #allocation3 [shape = 's32[1]{0}', space=sflag, size = 0x4, scoped, tag = 'scoped memory for tpu_custom_call.1']
    %12 = vsyncpa [#allocation3], 0
    // Predicated region
    $region2: #{tpu_custom_call.1} parent=1 // pred_check
      _
    $region3: #{tpu_custom_call.1} parent=1 // pred_check_branch
      %14 = sbr.rel (0) target = $region5
    $region4: #{tpu_custom_call.1} parent=1 // pred_region
      _
    $region5: #{tpu_custom_call.1} parent=1 // pred_fallthru
      _
    // Predicated region
    $region6: #{tpu_custom_call.1} parent=1 // pred_check
      _
    $region7: #{tpu_custom_call.1} parent=1 // pred_check_branch
      %16 = sbr.rel (0) target = $region9
    $region8: #{tpu_custom_call.1} parent=1 // pred_region
      _
    $region9: #{tpu_custom_call.1} parent=1 // pred_fallthru
      _
    // Predicated region
    $region10: #{tpu_custom_call.1} parent=1 // pred_check
      _
    $region11: #{tpu_custom_call.1} parent=1 // pred_check_branch
      %18 = sbr.rel (0) target = $region13
    $region12: #{tpu_custom_call.1} parent=1 // pred_region
      _
    $region13: #{tpu_custom_call.1} parent=1 // pred_fallthru
      _
    // Predicated region
    $region14: #{tpu_custom_call.1} parent=1 // pred_check
      _
    $region15: #{tpu_custom_call.1} parent=1 // pred_check_branch
      %20 = sbr.rel (0) target = $region17
    $region16: #{tpu_custom_call.1} parent=1 // pred_region
      _
    $region17: #{tpu_custom_call.1} parent=1 // pred_fallthru
      _
    // Predicated region
    $region18: #{tpu_custom_call.1} parent=1 // pred_check
      _
    $region19: #{tpu_custom_call.1} parent=1 // pred_check_branch
      %22 = sbr.rel (0) target = $region21
    $region20: #{tpu_custom_call.1} parent=1 // pred_region
      _
    $region21: #{tpu_custom_call.1} parent=1 // pred_fallthru
      _
    // Predicated region
    $region22: #{tpu_custom_call.1} parent=1 // pred_check
      _
    $region23: #{tpu_custom_call.1} parent=1 // pred_check_branch
      %24 = sbr.rel (0) target = $region25
    $region24: #{tpu_custom_call.1} parent=1 // pred_region
      _
    $region25: #{tpu_custom_call.1} parent=1 // pred_fallthru
      _
    // Predicated region
    $region26: #{tpu_custom_call.1} parent=1 // pred_check
      _
    $region27: #{tpu_custom_call.1} parent=1 // pred_check_branch
      %26 = sbr.rel (0) target = $region29
    $region28: #{tpu_custom_call.1} parent=1 // pred_region
      _
    $region29: #{tpu_custom_call.1} parent=1 // pred_fallthru
      _
    %v28 = vld [vmem:[%s0] sm:$0xff]
    %v29 = vpack.c.bf16 %v28, %v28
    %v30 = vld [vmem:[%s1] sm:$0xf]
    %v31 = vld [vmem:[%s1 + $0x4] sm:$0xf]
    %v32 = vld [vmem:[%s1 + $0x8] sm:$0xf]
    %v33 = vld [vmem:[%s1 + $0xc] sm:$0xf]
    %v34 = vld [vmem:[%s1 + $0x10] sm:$0xf]
    %v35 = vld [vmem:[%s1 + $0x14] sm:$0xf]
    %v36 = vld [vmem:[%s1 + $0x18] sm:$0xf]
    %v37 = vld [vmem:[%s1 + $0x1c] sm:$0xf]
    %v38 = vld [vmem:[%s1 + $0x20] sm:$0xf]
    %v39 = vld [vmem:[%s1 + $0x24] sm:$0xf]
    %v40 = vld [vmem:[%s1 + $0x28] sm:$0xf]
    %v41 = vld [vmem:[%s1 + $0x2c] sm:$0xf]
    %v42 = vld [vmem:[%s1 + $0x30] sm:$0xf]
    %v43 = vld [vmem:[%s1 + $0x34] sm:$0xf]
    %v44 = vld [vmem:[%s1 + $0x38] sm:$0xf]
    %v45 = vld [vmem:[%s1 + $0x3c] sm:$0xf]
    %v46 = vld [vmem:[%s2] sm:$0xff]
    %v47 = vld [vmem:[%s2 + $0x8] sm:$0xff]
    %v48 = vld [vmem:[%s2 + $0x10] sm:$0xff]
    %v49 = vld [vmem:[%s2 + $0x18] sm:$0xff]
    %v50 = vld [vmem:[%s2 + $0x20] sm:$0xff]
    %v51 = vld [vmem:[%s2 + $0x28] sm:$0xff]
    %v52 = vld [vmem:[%s2 + $0x30] sm:$0xff]
    %v53 = vld [vmem:[%s2 + $0x38] sm:$0xff]
    %v54 = vld [vmem:[%s2 + $0x40] sm:$0xff]
    %v55 = vld [vmem:[%s2 + $0x48] sm:$0xff]
    %v56 = vld [vmem:[%s2 + $0x50] sm:$0xff]
    %v57 = vld [vmem:[%s2 + $0x58] sm:$0xff]
    %v58 = vld [vmem:[%s2 + $0x60] sm:$0xff]
    %v59 = vld [vmem:[%s2 + $0x68] sm:$0xff]
    %v60 = vld [vmem:[%s2 + $0x70] sm:$0xff]
    %v61 = vld [vmem:[%s2 + $0x78] sm:$0xff]
    %63 = vset.pattern.permute.xlu0 0
    %64 = vperm.xlu0 %63, %v46
    %v65 = vpop.permute.xlu0 %64
    %68 = vset.pattern.permute.xlu0 0
    %69 = vperm.xlu0 %68, %v47
    %v70 = vpop.permute.xlu0 %69
    %73 = vset.pattern.permute.xlu0 0
    %74 = vperm.xlu0 %73, %v48
    %v75 = vpop.permute.xlu0 %74
    %78 = vset.pattern.permute.xlu0 0
    %79 = vperm.xlu0 %78, %v49
    %v80 = vpop.permute.xlu0 %79
    %83 = vset.pattern.permute.xlu0 0
    %84 = vperm.xlu0 %83, %v50
    %v85 = vpop.permute.xlu0 %84
    %88 = vset.pattern.permute.xlu0 0
    %89 = vperm.xlu0 %88, %v51
    %v90 = vpop.permute.xlu0 %89
    %93 = vset.pattern.permute.xlu0 0
    %94 = vperm.xlu0 %93, %v52
    %v95 = vpop.permute.xlu0 %94
    %98 = vset.pattern.permute.xlu0 0
    %99 = vperm.xlu0 %98, %v53
    %v100 = vpop.permute.xlu0 %99
    %103 = vset.pattern.permute.xlu0 0
    %104 = vperm.xlu0 %103, %v54
    %v105 = vpop.permute.xlu0 %104
    %108 = vset.pattern.permute.xlu0 0
    %109 = vperm.xlu0 %108, %v55
    %v110 = vpop.permute.xlu0 %109
    %113 = vset.pattern.permute.xlu0 0
    %114 = vperm.xlu0 %113, %v56
    %v115 = vpop.permute.xlu0 %114
    %118 = vset.pattern.permute.xlu0 0
    %119 = vperm.xlu0 %118, %v57
    %v120 = vpop.permute.xlu0 %119
    %123 = vset.pattern.permute.xlu0 0
    %124 = vperm.xlu0 %123, %v58
    %v125 = vpop.permute.xlu0 %124
    %128 = vset.pattern.permute.xlu0 0
    %129 = vperm.xlu0 %128, %v59
    %v130 = vpop.permute.xlu0 %129
    %133 = vset.pattern.permute.xlu0 0
    %134 = vperm.xlu0 %133, %v60
    %v135 = vpop.permute.xlu0 %134
    %138 = vset.pattern.permute.xlu0 0
    %139 = vperm.xlu0 %138, %v61
    %v140 = vpop.permute.xlu0 %139
    %v158 = vunpack.c.l.b16 %v30
    %v159 = vunpack.c.l.b16 %v31
    %v160 = vunpack.c.l.b16 %v32
    %v161 = vunpack.c.l.b16 %v33
    %v162 = vunpack.c.l.b16 %v34
    %v163 = vunpack.c.l.b16 %v35
    %v164 = vunpack.c.l.b16 %v36
    %v165 = vunpack.c.l.b16 %v37
    %v166 = vunpack.c.l.b16 %v38
    %v167 = vunpack.c.l.b16 %v39
    %v168 = vunpack.c.l.b16 %v40
    %v169 = vunpack.c.l.b16 %v41
    %v170 = vunpack.c.l.b16 %v42
    %v171 = vunpack.c.l.b16 %v43
    %v172 = vunpack.c.l.b16 %v44
    %v173 = vunpack.c.l.b16 %v45
    %v174 = vpack.c.b16 %v159, %v158
    %v175 = vpack.c.b16 %v161, %v160
    %v176 = vpack.c.b16 %v163, %v162
    %v177 = vpack.c.b16 %v165, %v164
    %v178 = vpack.c.b16 %v167, %v166
    %v179 = vpack.c.b16 %v169, %v168
    %v180 = vpack.c.b16 %v171, %v170
    %v181 = vpack.c.b16 %v173, %v172
    %vm182 = vcmask 64512
    %v184 = vsel %vm182, %v174, 0
    %v187 = vsel %vm182, %v175, 0
    %v190 = vsel %vm182, %v176, 0
    %v193 = vsel %vm182, %v177, 0
    %v196 = vsel %vm182, %v178, 0
    %v199 = vsel %vm182, %v179, 0
    %v202 = vsel %vm182, %v180, 0
    %v205 = vsel %vm182, %v181, 0
    %vm207 = vcmask 1043456
    %v209 = vsel %vm207, %v29, 0
    %211 = vmatprep.subr.bf16.mxu0 0
    %212 = vmatpush1.bf16.msra.mxu0 %v209
    %213 = vmatprep.subr.bf16.mxu0 0
    %214 = vmatpush1.bf16.msra.mxu0 0
    %215 = vmatprep.subr.bf16.mxu0 0
    %216 = vmatpush1.bf16.msra.mxu0 0
    %217 = vmatprep.subr.bf16.mxu0 0
    %218 = vmatpush1.bf16.msra.mxu0 0
    %219 = vmatprep.subr.bf16.mxu0 0
    %220 = vmatpush1.bf16.msra.mxu0 0
    %221 = vmatprep.subr.bf16.mxu0 0
    %222 = vmatpush1.bf16.msra.mxu0 0
    %223 = vmatprep.subr.bf16.mxu0 0
    %224 = vmatpush1.bf16.msra.mxu0 0
    %225 = vmatprep.subr.bf16.mxu0 0
    %226 = vmatpush1.bf16.msra.mxu0 0
    %227 = vmatprep.subr.bf16.mxu0 0
    %228 = vmatpush1.bf16.msra.mxu0 0
    %229 = vmatprep.subr.bf16.mxu0 0
    %230 = vmatpush1.bf16.msra.mxu0 0
    %231 = vmatprep.subr.bf16.mxu0 0
    %232 = vmatpush1.bf16.msra.mxu0 0
    %233 = vmatprep.subr.bf16.mxu0 0
    %234 = vmatpush1.bf16.msra.mxu0 0
    %235 = vmatprep.subr.bf16.mxu0 0
    %236 = vmatpush1.bf16.msra.mxu0 0
    %237 = vmatprep.subr.bf16.mxu0 0
    %238 = vmatpush1.bf16.msra.mxu0 0
    %239 = vmatprep.subr.bf16.mxu0 0
    %240 = vmatpush1.bf16.msra.mxu0 0
    %241 = vmatprep.subr.bf16.mxu0 0
    %242 = vmatpush1.bf16.msra.mxu0 0
    %243 = vmatprep.mubr.bf16.mxu0 0
    %244 = vmatmul.mubr.bf16.gmra.mrb[0].mxu0 %v184
    %v245 = vpop.f32.mrb[0].mxu0
    %v246 = vadd.f32 %v65, %v245
    %v247 = vpop.f32.mrb[0].mxu0
    %v248 = vpop.f32.mrb[0].mxu0
    %v249 = vadd.f32 %v70, %v248
    %v250 = vpop.f32.mrb[0].mxu0
    %251 = vmatprep.mubr.bf16.mxu0 0
    %252 = vmatmul.mubr.bf16.gmra.mrb[0].mxu0 %v187
    %v253 = vpop.f32.mrb[0].mxu0
    %v254 = vadd.f32 %v75, %v253
    %v255 = vpop.f32.mrb[0].mxu0
    %v256 = vpop.f32.mrb[0].mxu0
    %v257 = vadd.f32 %v80, %v256
    %v258 = vpop.f32.mrb[0].mxu0
    %259 = vmatprep.mubr.bf16.mxu0 0
    %260 = vmatmul.mubr.bf16.gmra.mrb[0].mxu0 %v190
    %v261 = vpop.f32.mrb[0].mxu0
    %v262 = vadd.f32 %v85, %v261
    %v263 = vpop.f32.mrb[0].mxu0
    %v264 = vpop.f32.mrb[0].mxu0
    %v265 = vadd.f32 %v90, %v264
    %v266 = vpop.f32.mrb[0].mxu0
    %267 = vmatprep.mubr.bf16.mxu0 0
    %268 = vmatmul.mubr.bf16.gmra.mrb[0].mxu0 %v193
    %v269 = vpop.f32.mrb[0].mxu0
    %v270 = vadd.f32 %v95, %v269
    %v271 = vpop.f32.mrb[0].mxu0
    %v272 = vpop.f32.mrb[0].mxu0
    %v273 = vadd.f32 %v100, %v272
    %v274 = vpop.f32.mrb[0].mxu0
    %275 = vmatprep.mubr.bf16.mxu0 0
    %276 = vmatmul.mubr.bf16.gmra.mrb[0].mxu0 %v196
    %v277 = vpop.f32.mrb[0].mxu0
    %v278 = vadd.f32 %v105, %v277
    %v279 = vpop.f32.mrb[0].mxu0
    %v280 = vpop.f32.mrb[0].mxu0
    %v281 = vadd.f32 %v110, %v280
    %v282 = vpop.f32.mrb[0].mxu0
    %283 = vmatprep.mubr.bf16.mxu0 0
    %284 = vmatmul.mubr.bf16.gmra.mrb[0].mxu0 %v199
    %v285 = vpop.f32.mrb[0].mxu0
    %v286 = vadd.f32 %v115, %v285
    %v287 = vpop.f32.mrb[0].mxu0
    %v288 = vpop.f32.mrb[0].mxu0
    %v289 = vadd.f32 %v120, %v288
    %v290 = vpop.f32.mrb[0].mxu0
    %291 = vmatprep.mubr.bf16.mxu0 0
    %292 = vmatmul.mubr.bf16.gmra.mrb[0].mxu0 %v202
    %v293 = vpop.f32.mrb[0].mxu0
    %v294 = vadd.f32 %v125, %v293
    %v295 = vpop.f32.mrb[0].mxu0
    %v296 = vpop.f32.mrb[0].mxu0
    %v297 = vadd.f32 %v130, %v296
    %v298 = vpop.f32.mrb[0].mxu0
    %299 = vmatprep.mubr.bf16.mxu0 0
    %300 = vmatmul.mubr.bf16.gmra.mrb[0].mxu0 %v205
    %v301 = vpop.f32.mrb[0].mxu0
    %v302 = vadd.f32 %v135, %v301
    %v303 = vpop.f32.mrb[0].mxu0
    %v304 = vpop.f32.mrb[0].mxu0
    %v305 = vadd.f32 %v140, %v304
    %v306 = vpop.f32.mrb[0].mxu0
    %307 = vdwg.mxu0
    %v308 = vmax.f32 %v246, 0.0
    %v309 = vmax.f32 %v249, 0.0
    %v310 = vmax.f32 %v254, 0.0
    %v311 = vmax.f32 %v257, 0.0
    %v312 = vmax.f32 %v262, 0.0
    %v313 = vmax.f32 %v265, 0.0
    %v314 = vmax.f32 %v270, 0.0
    %v315 = vmax.f32 %v273, 0.0
    %v316 = vmax.f32 %v278, 0.0
    %v317 = vmax.f32 %v281, 0.0
    %v318 = vmax.f32 %v286, 0.0
    %v319 = vmax.f32 %v289, 0.0
    %v320 = vmax.f32 %v294, 0.0
    %v321 = vmax.f32 %v297, 0.0
    %v322 = vmax.f32 %v302, 0.0
    %v323 = vmax.f32 %v305, 0.0
    %v324 = vld [vmem:[%s3] sm:$0xf]
    %v325 = vld [vmem:[%s3 + $0x4] sm:$0xf]
    %v326 = vld [vmem:[%s3 + $0x8] sm:$0xf]
    %v327 = vld [vmem:[%s3 + $0xc] sm:$0xf]
    %v328 = vld [vmem:[%s3 + $0x10] sm:$0xf]
    %v329 = vld [vmem:[%s3 + $0x14] sm:$0xf]
    %v330 = vld [vmem:[%s3 + $0x18] sm:$0xf]
    %v331 = vld [vmem:[%s3 + $0x1c] sm:$0xf]
    %v332 = vld [vmem:[%s3 + $0x20] sm:$0xf]
    %v333 = vld [vmem:[%s3 + $0x24] sm:$0xf]
    %v334 = vld [vmem:[%s3 + $0x28] sm:$0xf]
    %v335 = vld [vmem:[%s3 + $0x2c] sm:$0xf]
    %v336 = vld [vmem:[%s3 + $0x30] sm:$0xf]
    %v337 = vld [vmem:[%s3 + $0x34] sm:$0xf]
    %v338 = vld [vmem:[%s3 + $0x38] sm:$0xf]
    %v339 = vld [vmem:[%s3 + $0x3c] sm:$0xf]
    %v340 = vpack.c.bf16 %v309, %v308
    %v341 = vpack.c.bf16 %v311, %v310
    %v342 = vpack.c.bf16 %v313, %v312
    %v343 = vpack.c.bf16 %v315, %v314
    %v344 = vpack.c.bf16 %v317, %v316
    %v345 = vpack.c.bf16 %v319, %v318
    %v346 = vpack.c.bf16 %v321, %v320
    %v347 = vpack.c.bf16 %v323, %v322
    %v348 = vld [vmem:[%s4] sm:$0xff]
    %v349 = vld [vmem:[%s4 + $0x8] sm:$0xff]
    %v350 = vld [vmem:[%s4 + $0x10] sm:$0xff]
    %v351 = vld [vmem:[%s4 + $0x18] sm:$0xff]
    %v352 = vld [vmem:[%s4 + $0x20] sm:$0xff]
    %v353 = vld [vmem:[%s4 + $0x28] sm:$0xff]
    %v354 = vld [vmem:[%s4 + $0x30] sm:$0xff]
    %v355 = vld [vmem:[%s4 + $0x38] sm:$0xff]
    %v356 = vld [vmem:[%s4 + $0x40] sm:$0xff]
    %v357 = vld [vmem:[%s4 + $0x48] sm:$0xff]
    %v358 = vld [vmem:[%s4 + $0x50] sm:$0xff]
    %v359 = vld [vmem:[%s4 + $0x58] sm:$0xff]
    %v360 = vld [vmem:[%s4 + $0x60] sm:$0xff]
    %v361 = vld [vmem:[%s4 + $0x68] sm:$0xff]
    %v362 = vld [vmem:[%s4 + $0x70] sm:$0xff]
    %v363 = vld [vmem:[%s4 + $0x78] sm:$0xff]
    %365 = vset.pattern.permute.xlu0 0
    %366 = vperm.xlu0 %365, %v348
    %v367 = vpop.permute.xlu0 %366
    %370 = vset.pattern.permute.xlu0 0
    %371 = vperm.xlu0 %370, %v349
    %v372 = vpop.permute.xlu0 %371
    %375 = vset.pattern.permute.xlu0 0
    %376 = vperm.xlu0 %375, %v350
    %v377 = vpop.permute.xlu0 %376
    %380 = vset.pattern.permute.xlu0 0
    %381 = vperm.xlu0 %380, %v351
    %v382 = vpop.permute.xlu0 %381
    %385 = vset.pattern.permute.xlu0 0
    %386 = vperm.xlu0 %385, %v352
    %v387 = vpop.permute.xlu0 %386
    %390 = vset.pattern.permute.xlu0 0
    %391 = vperm.xlu0 %390, %v353
    %v392 = vpop.permute.xlu0 %391
    %395 = vset.pattern.permute.xlu0 0
    %396 = vperm.xlu0 %395, %v354
    %v397 = vpop.permute.xlu0 %396
    %400 = vset.pattern.permute.xlu0 0
    %401 = vperm.xlu0 %400, %v355
    %v402 = vpop.permute.xlu0 %401
    %405 = vset.pattern.permute.xlu0 0
    %406 = vperm.xlu0 %405, %v356
    %v407 = vpop.permute.xlu0 %406
    %410 = vset.pattern.permute.xlu0 0
    %411 = vperm.xlu0 %410, %v357
    %v412 = vpop.permute.xlu0 %411
    %415 = vset.pattern.permute.xlu0 0
    %416 = vperm.xlu0 %415, %v358
    %v417 = vpop.permute.xlu0 %416
    %420 = vset.pattern.permute.xlu0 0
    %421 = vperm.xlu0 %420, %v359
    %v422 = vpop.permute.xlu0 %421
    %425 = vset.pattern.permute.xlu0 0
    %426 = vperm.xlu0 %425, %v360
    %v427 = vpop.permute.xlu0 %426
    %430 = vset.pattern.permute.xlu0 0
    %431 = vperm.xlu0 %430, %v361
    %v432 = vpop.permute.xlu0 %431
    %435 = vset.pattern.permute.xlu0 0
    %436 = vperm.xlu0 %435, %v362
    %v437 = vpop.permute.xlu0 %436
    %440 = vset.pattern.permute.xlu0 0
    %441 = vperm.xlu0 %440, %v363
    %v442 = vpop.permute.xlu0 %441
    %v460 = vunpack.c.l.b16 %v324
    %v461 = vunpack.c.l.b16 %v325
    %v462 = vunpack.c.l.b16 %v326
    %v463 = vunpack.c.l.b16 %v327
    %v464 = vunpack.c.l.b16 %v328
    %v465 = vunpack.c.l.b16 %v329
    %v466 = vunpack.c.l.b16 %v330
    %v467 = vunpack.c.l.b16 %v331
    %v468 = vunpack.c.l.b16 %v332
    %v469 = vunpack.c.l.b16 %v333
    %v470 = vunpack.c.l.b16 %v334
    %v471 = vunpack.c.l.b16 %v335
    %v472 = vunpack.c.l.b16 %v336
    %v473 = vunpack.c.l.b16 %v337
    %v474 = vunpack.c.l.b16 %v338
    %v475 = vunpack.c.l.b16 %v339
    %v476 = vpack.c.b16 %v461, %v460
    %v477 = vpack.c.b16 %v463, %v462
    %v478 = vpack.c.b16 %v465, %v464
    %v479 = vpack.c.b16 %v467, %v466
    %v480 = vpack.c.b16 %v469, %v468
    %v481 = vpack.c.b16 %v471, %v470
    %v482 = vpack.c.b16 %v473, %v472
    %v483 = vpack.c.b16 %v475, %v474
    %492 = vmatprep.subr.bf16.mxu0 0
    %493 = vmatpush1.bf16.msra.mxu0 %v340
    %494 = vmatprep.subr.bf16.mxu0 0
    %495 = vmatpush1.bf16.msra.mxu0 %v341
    %496 = vmatprep.subr.bf16.mxu0 0
    %497 = vmatpush1.bf16.msra.mxu0 %v342
    %498 = vmatprep.subr.bf16.mxu0 0
    %499 = vmatpush1.bf16.msra.mxu0 %v343
    %500 = vmatprep.subr.bf16.mxu0 0
    %501 = vmatpush1.bf16.msra.mxu0 %v344
    %502 = vmatprep.subr.bf16.mxu0 0
    %503 = vmatpush1.bf16.msra.mxu0 %v345
    %504 = vmatprep.subr.bf16.mxu0 0
    %505 = vmatpush1.bf16.msra.mxu0 %v346
    %506 = vmatprep.subr.bf16.mxu0 0
    %507 = vmatpush1.bf16.msra.mxu0 %v347
    %508 = vmatprep.subr.bf16.mxu0 0
    %509 = vmatpush1.bf16.msra.mxu0 0
    %510 = vmatprep.subr.bf16.mxu0 0
    %511 = vmatpush1.bf16.msra.mxu0 0
    %512 = vmatprep.subr.bf16.mxu0 0
    %513 = vmatpush1.bf16.msra.mxu0 0
    %514 = vmatprep.subr.bf16.mxu0 0
    %515 = vmatpush1.bf16.msra.mxu0 0
    %516 = vmatprep.subr.bf16.mxu0 0
    %517 = vmatpush1.bf16.msra.mxu0 0
    %518 = vmatprep.subr.bf16.mxu0 0
    %519 = vmatpush1.bf16.msra.mxu0 0
    %520 = vmatprep.subr.bf16.mxu0 0
    %521 = vmatpush1.bf16.msra.mxu0 0
    %522 = vmatprep.subr.bf16.mxu0 0
    %523 = vmatpush1.bf16.msra.mxu0 0
    %524 = vmatprep.mubr.bf16.mxu0 0
    %525 = vmatmul.mubr.bf16.gmra.mrb[0].mxu0 %v476
    %v526 = vpop.f32.mrb[0].mxu0
    %v527 = vadd.f32 %v367, %v526
    %v528 = vpop.f32.mrb[0].mxu0
    %v529 = vpop.f32.mrb[0].mxu0
    %v530 = vadd.f32 %v372, %v529
    %v531 = vpop.f32.mrb[0].mxu0
    %532 = vmatprep.mubr.bf16.mxu0 0
    %533 = vmatmul.mubr.bf16.gmra.mrb[0].mxu0 %v477
    %v534 = vpop.f32.mrb[0].mxu0
    %v535 = vadd.f32 %v377, %v534
    %v536 = vpop.f32.mrb[0].mxu0
    %v537 = vpop.f32.mrb[0].mxu0
    %v538 = vadd.f32 %v382, %v537
    %v539 = vpop.f32.mrb[0].mxu0
    %540 = vmatprep.mubr.bf16.mxu0 0
    %541 = vmatmul.mubr.bf16.gmra.mrb[0].mxu0 %v478
    %v542 = vpop.f32.mrb[0].mxu0
    %v543 = vadd.f32 %v387, %v542
    %v544 = vpop.f32.mrb[0].mxu0
    %v545 = vpop.f32.mrb[0].mxu0
    %v546 = vadd.f32 %v392, %v545
    %v547 = vpop.f32.mrb[0].mxu0
    %548 = vmatprep.mubr.bf16.mxu0 0
    %549 = vmatmul.mubr.bf16.gmra.mrb[0].mxu0 %v479
    %v550 = vpop.f32.mrb[0].mxu0
    %v551 = vadd.f32 %v397, %v550
    %v552 = vpop.f32.mrb[0].mxu0
    %v553 = vpop.f32.mrb[0].mxu0
    %v554 = vadd.f32 %v402, %v553
    %v555 = vpop.f32.mrb[0].mxu0
    %556 = vmatprep.mubr.bf16.mxu0 0
    %557 = vmatmul.mubr.bf16.gmra.mrb[0].mxu0 %v480
    %v558 = vpop.f32.mrb[0].mxu0
    %v559 = vadd.f32 %v407, %v558
    %v560 = vpop.f32.mrb[0].mxu0
    %v561 = vpop.f32.mrb[0].mxu0
    %v562 = vadd.f32 %v412, %v561
    %v563 = vpop.f32.mrb[0].mxu0
    %564 = vmatprep.mubr.bf16.mxu0 0
    %565 = vmatmul.mubr.bf16.gmra.mrb[0].mxu0 %v481
    %v566 = vpop.f32.mrb[0].mxu0
    %v567 = vadd.f32 %v417, %v566
    %v568 = vpop.f32.mrb[0].mxu0
    %v569 = vpop.f32.mrb[0].mxu0
    %v570 = vadd.f32 %v422, %v569
    %v571 = vpop.f32.mrb[0].mxu0
    %572 = vmatprep.mubr.bf16.mxu0 0
    %573 = vmatmul.mubr.bf16.gmra.mrb[0].mxu0 %v482
    %v574 = vpop.f32.mrb[0].mxu0
    %v575 = vadd.f32 %v427, %v574
    %v576 = vpop.f32.mrb[0].mxu0
    %v577 = vpop.f32.mrb[0].mxu0
    %v578 = vadd.f32 %v432, %v577
    %v579 = vpop.f32.mrb[0].mxu0
    %580 = vmatprep.mubr.bf16.mxu0 0
    %581 = vmatmul.mubr.bf16.gmra.mrb[0].mxu0 %v483
    %v582 = vpop.f32.mrb[0].mxu0
    %v583 = vadd.f32 %v437, %v582
    %v584 = vpop.f32.mrb[0].mxu0
    %v585 = vpop.f32.mrb[0].mxu0
    %v586 = vadd.f32 %v442, %v585
    %v587 = vpop.f32.mrb[0].mxu0
    %588 = vdwg.mxu0
    %v589 = vmax.f32 %v527, 0.0
    %v590 = vmax.f32 %v530, 0.0
    %v591 = vmax.f32 %v535, 0.0
    %v592 = vmax.f32 %v538, 0.0
    %v593 = vmax.f32 %v543, 0.0
    %v594 = vmax.f32 %v546, 0.0
    %v595 = vmax.f32 %v551, 0.0
    %v596 = vmax.f32 %v554, 0.0
    %v597 = vmax.f32 %v559, 0.0
    %v598 = vmax.f32 %v562, 0.0
    %v599 = vmax.f32 %v567, 0.0
    %v600 = vmax.f32 %v570, 0.0
    %v601 = vmax.f32 %v575, 0.0
    %v602 = vmax.f32 %v578, 0.0
    %v603 = vmax.f32 %v583, 0.0
    %v604 = vmax.f32 %v586, 0.0
    %v605 = vld [vmem:[%s5] sm:$0x3]
    %v606 = vpack.c.bf16 %v590, %v589
    %v607 = vpack.c.bf16 %v592, %v591
    %v608 = vpack.c.bf16 %v594, %v593
    %v609 = vpack.c.bf16 %v596, %v595
    %v610 = vpack.c.bf16 %v598, %v597
    %v611 = vpack.c.bf16 %v600, %v599
    %v612 = vpack.c.bf16 %v602, %v601
    %v613 = vpack.c.bf16 %v604, %v603
    %v614 = vld [vmem:[%s6] sm:$0xf]
    %616 = vset.pattern.permute.xlu0 0
    %617 = vperm.xlu0 %616, %v614
    %v618 = vpop.permute.xlu0 %617
    %620 = vmatprep.subr.bf16.mxu0 0
    %621 = vmatpush1.bf16.msra.mxu0 %v606
    %622 = vmatprep.subr.bf16.mxu0 0
    %623 = vmatpush1.bf16.msra.mxu0 %v607
    %624 = vmatprep.subr.bf16.mxu0 0
    %625 = vmatpush1.bf16.msra.mxu0 %v608
    %626 = vmatprep.subr.bf16.mxu0 0
    %627 = vmatpush1.bf16.msra.mxu0 %v609
    %628 = vmatprep.subr.bf16.mxu0 0
    %629 = vmatpush1.bf16.msra.mxu0 %v610
    %630 = vmatprep.subr.bf16.mxu0 0
    %631 = vmatpush1.bf16.msra.mxu0 %v611
    %632 = vmatprep.subr.bf16.mxu0 0
    %633 = vmatpush1.bf16.msra.mxu0 %v612
    %634 = vmatprep.subr.bf16.mxu0 0
    %635 = vmatpush1.bf16.msra.mxu0 %v613
    %636 = vmatprep.subr.bf16.mxu0 0
    %637 = vmatpush1.bf16.msra.mxu0 0
    %638 = vmatprep.subr.bf16.mxu0 0
    %639 = vmatpush1.bf16.msra.mxu0 0
    %640 = vmatprep.subr.bf16.mxu0 0
    %641 = vmatpush1.bf16.msra.mxu0 0
    %642 = vmatprep.subr.bf16.mxu0 0
    %643 = vmatpush1.bf16.msra.mxu0 0
    %644 = vmatprep.subr.bf16.mxu0 0
    %645 = vmatpush1.bf16.msra.mxu0 0
    %646 = vmatprep.subr.bf16.mxu0 0
    %647 = vmatpush1.bf16.msra.mxu0 0
    %648 = vmatprep.subr.bf16.mxu0 0
    %649 = vmatpush1.bf16.msra.mxu0 0
    %650 = vmatprep.subr.bf16.mxu0 0
    %651 = vmatpush1.bf16.msra.mxu0 0
    %652 = vmatprep.mubr.bf16.mxu0 0
    %653 = vmatmul.mubr.bf16.gmra.mrb[0].mxu0 %v605
    %v654 = vpop.f32.mrb[0].mxu0
    %v655 = vadd.f32 %v618, %v654
    %v656 = vpop.f32.mrb[0].mxu0
    %v657 = vpop.f32.mrb[0].mxu0
    %v658 = vpop.f32.mrb[0].mxu0
    %659 = vdwg.mxu0
    %660 = vst [vmem:[#allocation2] sm:$0xf] %v655
    // Predicated region
    $region30: #{tpu_custom_call.1} parent=1 // pred_check
      _
    $region31: #{tpu_custom_call.1} parent=1 // pred_check_branch
      %662 = sbr.rel (0) target = $region33
    $region32: #{tpu_custom_call.1} parent=1 // pred_region
      %s664 = ssub.s32 64, 64
      %665 = vsyncadd [#allocation3], %s664
      %s667 = sshll.u32 [#allocation2], 4
      %s668 = int_to_ptr.vmem [resolvable:$true] %s667
      %670 = dma.vmem_to_hbm [thread:$0]  %s668, 64, %s7, [#allocation3]
    $region33: #{tpu_custom_call.1} parent=1 // pred_fallthru
      _
    // Predicated region
    $region34: #{tpu_custom_call.1} parent=1 // pred_check
      _
    $region35: #{tpu_custom_call.1} parent=1 // pred_check_branch
      %672 = sbr.rel (0) target = $region37
    $region36: #{tpu_custom_call.1} parent=1 // pred_region
      %673 = dma.done [#allocation3], 64
    $region37: #{tpu_custom_call.1} parent=1 // pred_fallthru
      _
    %674 = vsyncpa [#allocation3], 1

</llo_original>
